<compile_context>
chip_gen: v6e
topology: v6e:2x2x1
jax: 0.10.0
libtpu: 0.0.40
codegen_flags: <defaults>
</compile_context>

<pallas_src>
import jax
import jax.numpy as jnp
from jax.experimental import pallas as pl
from jax.experimental.pallas import tpu as pltpu


def _gelu_tanh(x):
    # TODO(synk): PyTorch nn.GELU() defaults to the exact erf GELU; erf may not
    # lower in Mosaic, so the tanh approximation is used (max abs diff ~1e-3).
    return 0.5 * x * (1.0 + jnp.tanh(0.7978845608028654 * (x + 0.044715 * x * x * x)))


def _mlp_kernel(x_ref, w1_ref, b1_ref, w2_ref, b2_ref, o_ref):
    # In-kernel bf16 cast of activations (hides under the MXU slot; avoids a
    # separate un-fused cast pass over HBM in the wrapper).
    x = x_ref[...].astype(jnp.bfloat16)                                # (TM, dim)
    z = jnp.dot(x, w1_ref[...], preferred_element_type=jnp.float32)    # MXU, f32 acc
    # f32 epilogue (portable: v5e's VPU/EUP have no bf16).  When M is not a
    # multiple of TM, the padded rows of the last block carry garbage through
    # tanh; that's fine -- rows are independent and masked on the final store.
    z = _gelu_tanh(z + b1_ref[...])
    # nn.Dropout layers are identity at inference time.
    y = jnp.dot(z.astype(jnp.bfloat16), w2_ref[...],
                preferred_element_type=jnp.float32) + b2_ref[...]      # MXU, f32 acc
    o_ref[...] = y.astype(o_ref.dtype)


def _round_up(x, m):
    return (x + m - 1) // m * m


def _choose_tm(M, tm_max, min_steps):
    """Row tile: multiple of 8, <= tm_max, and >= min_steps grid steps."""
    if M <= 8:
        return M                      # single full-extent block
    tm = _round_up(-(-M // min_steps), 8)
    return max(8, min(tm, tm_max))


def mlp_block(x, w1, b1, w2, b2, *, tm_max=512, min_row_steps=2,
              out_dtype=jnp.bfloat16):
    """Fused Linear -> GELU -> Linear over x of shape (..., dim).

    Contract: operands are quantized to bf16 for the MXU (f32 accumulate) and
    the result is emitted in `out_dtype` (bf16 by default) -- an intentional
    inference-time precision reduction vs the f32 PyTorch module.
    """
    orig_shape = x.shape
    dim = orig_shape[-1]
    hidden = w1.shape[1]
    assert w1.shape == (dim, hidden) and w2.shape == (hidden, dim)
    assert b1.shape == (hidden,) and b2.shape == (dim,)

    x2 = x.reshape(-1, dim)                      # keep input dtype; cast in-kernel
    M = x2.shape[0]
    tm = _choose_tm(M, tm_max, min_row_steps)
    grid = (pl.cdiv(M, tm),)

    # Pad hidden to a lane-dense multiple of 128 so matmul1's N and matmul2's K
    # fill the MXU and the GELU epilogue isn't mostly masked lanes.  Zero
    # padding leaves results unchanged.
    hidden_p = max(_round_up(hidden, 128), 128)
    pad_h = hidden_p - hidden
    w1b = jnp.pad(w1.astype(jnp.bfloat16), ((0, 0), (0, pad_h)))
    w2b = jnp.pad(w2.astype(jnp.bfloat16), ((0, pad_h), (0, 0)))
    b1r = jnp.pad(b1.astype(jnp.float32), (0, pad_h)).reshape(1, hidden_p)
    b2r = b2.astype(jnp.float32).reshape(1, dim)

    x_bytes = jnp.dtype(x2.dtype).itemsize
    o_bytes = jnp.dtype(out_dtype).itemsize
    w_bytes = (dim * hidden_p + hidden_p * dim) * 2 + (hidden_p + dim) * 4

    # Explicit VMEM budget: 2x double-buffered x/out tiles + resident weights +
    # f32 intermediate (and spill slack), with headroom.  Clamped to be safe on
    # v5e (16 MiB scoped default) and v7x (64 MiB physical).
    vmem_est = (2 * tm * dim * x_bytes + 2 * tm * dim * o_bytes
                + 2 * w_bytes + 2 * tm * hidden_p * 4)
    vmem_limit = int(min(max(2 * vmem_est + (4 << 20), 32 << 20), 64 << 20))

    cost = pl.CostEstimate(
        flops=4 * M * dim * hidden_p,
        transcendentals=M * hidden_p,
        bytes_accessed=M * dim * (x_bytes + o_bytes) + w_bytes,
    )

    out = pl.pallas_call(
        _mlp_kernel,
        out_shape=jax.ShapeDtypeStruct((M, dim), out_dtype),
        grid=grid,
        in_specs=[
            pl.BlockSpec((tm, dim), lambda i: (i, 0)),          # activations, M-tiled
            pl.BlockSpec((dim, hidden_p), lambda i: (0, 0)),    # W1 (resident)
            pl.BlockSpec((1, hidden_p), lambda i: (0, 0)),      # b1
            pl.BlockSpec((hidden_p, dim), lambda i: (0, 0)),    # W2 (resident)
            pl.BlockSpec((1, dim), lambda i: (0, 0)),           # b2
        ],
        out_specs=pl.BlockSpec((tm, dim), lambda i: (i, 0)),    # lane-dense (dim=128)
        compiler_params=pltpu.CompilerParams(
            dimension_semantics=("parallel",),
            vmem_limit_bytes=vmem_limit,
        ),
        cost_estimate=cost,
    )(x2, w1b, b1r, w2b, b2r)
    return out.reshape(orig_shape[:-1] + (dim,))


if __name__ == "__main__":
    key = jax.random.PRNGKey(0)
    kx, k1, kb1, k2, kb2 = jax.random.split(key, 5)

    # Small shapes consistent with the module: (batch, seq, dim) tokens.
    B, N, dim, hidden = 2, 8, 128, 32
    x = jax.random.normal(kx, (B, N, dim), jnp.float32)
    w1 = jax.random.normal(k1, (dim, hidden), jnp.float32) * dim ** -0.5
    b1 = jax.random.normal(kb1, (hidden,), jnp.float32) * 0.01
    w2 = jax.random.normal(k2, (hidden, dim), jnp.float32) * hidden ** -0.5
    b2 = jax.random.normal(kb2, (dim,), jnp.float32) * 0.01

    fwd = jax.jit(mlp_block)
    y = jax.block_until_ready(fwd(x, w1, b1, w2, b2))
    assert y.shape == (B, N, dim)
    assert y.dtype == jnp.bfloat16
    assert bool(jnp.all(jnp.isfinite(y.astype(jnp.float32))))

    # Plain-JAX reference with the same bf16 operand quantization and f32
    # accumulation; tolerance covers the bf16 output quantization of the kernel.
    def ref(x, w1, b1, w2, b2):
        bf = lambda a: a.astype(jnp.bfloat16)
        z = _gelu_tanh(jnp.dot(bf(x), bf(w1),
                               preferred_element_type=jnp.float32) + b1)
        return jnp.dot(bf(z), bf(w2), preferred_element_type=jnp.float32) + b2

    y_ref = ref(x, w1, b1, w2, b2)
    err = float(jnp.max(jnp.abs(y.astype(jnp.float32) - y_ref)))
    assert err < 5e-2, f"max abs err {err}"
    print("KERNEL_OK")
</pallas_src>

<mosaic_0001>
module attributes {stable_mosaic.version = 11 : i64} {
  func.func @_mlp_kernel(%arg0: i32, %arg1: memref<8x128xf32, #tpu.memory_space<vmem>>, %arg2: memref<128x128xbf16, #tpu.memory_space<vmem>>, %arg3: memref<1x128xf32, #tpu.memory_space<vmem>>, %arg4: memref<128x128xbf16, #tpu.memory_space<vmem>>, %arg5: memref<1x128xf32, #tpu.memory_space<vmem>>, %arg6: memref<8x128xbf16, #tpu.memory_space<vmem>>) attributes {dimension_semantics = [#tpu.dimension_semantics<parallel>], iteration_bounds = array<i64: 2>, scalar_prefetch = 0 : i64, scratch_operands = 0 : i64, tpu.core_type = #tpu.core_type<tc>, window_params = [{transform_indices = @transform_0, window_bounds = array<i64: 8, 128>}, {pipeline_mode = #tpu.pipeline_mode<synchronous>, transform_indices = @transform_1, window_bounds = array<i64: 128, 128>}, {pipeline_mode = #tpu.pipeline_mode<synchronous>, transform_indices = @transform_2, window_bounds = array<i64: 1, 128>}, {pipeline_mode = #tpu.pipeline_mode<synchronous>, transform_indices = @transform_3, window_bounds = array<i64: 128, 128>}, {pipeline_mode = #tpu.pipeline_mode<synchronous>, transform_indices = @transform_4, window_bounds = array<i64: 1, 128>}, {transform_indices = @transform_5, window_bounds = array<i64: 8, 128>}]} {
    %c0 = arith.constant 0 : index
    %c0_0 = arith.constant 0 : index
    %0 = vector.load %arg1[%c0, %c0_0] : memref<8x128xf32, #tpu.memory_space<vmem>>, vector<8x128xf32>
    %1 = arith.truncf %0 : vector<8x128xf32> to vector<8x128xbf16>
    %c0_1 = arith.constant 0 : index
    %c0_2 = arith.constant 0 : index
    %2 = vector.load %arg2[%c0_1, %c0_2] : memref<128x128xbf16, #tpu.memory_space<vmem>>, vector<128x128xbf16>
    %cst = arith.constant dense<0.000000e+00> : vector<8x128xf32>
    %3 = tpu.matmul %1, %2, %cst {dimension_numbers = #tpu.dot_dimension_numbers<[1], [0], [0], [1], [0, 0, 1, 1], [], []>} : vector<8x128xbf16>, vector<128x128xbf16>, vector<8x128xf32> -> vector<8x128xf32>
    %c0_3 = arith.constant 0 : index
    %c0_4 = arith.constant 0 : index
    %4 = vector.load %arg3[%c0_3, %c0_4] : memref<1x128xf32, #tpu.memory_space<vmem>>, vector<1x128xf32>
    %5 = vector.broadcast %4 : vector<1x128xf32> to vector<8x128xf32>
    %6 = arith.addf %3, %5 : vector<8x128xf32>
    %cst_5 = arith.constant 5.000000e-01 : f32
    %7 = vector.broadcast %cst_5 : f32 to vector<8x128xf32>
    %8 = arith.mulf %7, %6 : vector<8x128xf32>
    %cst_6 = arith.constant 4.471500e-02 : f32
    %9 = vector.broadcast %cst_6 : f32 to vector<8x128xf32>
    %10 = arith.mulf %9, %6 : vector<8x128xf32>
    %11 = arith.mulf %10, %6 : vector<8x128xf32>
    %12 = arith.mulf %11, %6 : vector<8x128xf32>
    %13 = arith.addf %6, %12 : vector<8x128xf32>
    %cst_7 = arith.constant 0.797884583 : f32
    %14 = vector.broadcast %cst_7 : f32 to vector<8x128xf32>
    %15 = arith.mulf %14, %13 : vector<8x128xf32>
    %16 = math.tanh %15 : vector<8x128xf32>
    %cst_8 = arith.constant 1.000000e+00 : f32
    %17 = vector.broadcast %cst_8 : f32 to vector<8x128xf32>
    %18 = arith.addf %17, %16 : vector<8x128xf32>
    %19 = arith.mulf %8, %18 : vector<8x128xf32>
    %20 = arith.truncf %19 : vector<8x128xf32> to vector<8x128xbf16>
    %c0_9 = arith.constant 0 : index
    %c0_10 = arith.constant 0 : index
    %21 = vector.load %arg4[%c0_9, %c0_10] : memref<128x128xbf16, #tpu.memory_space<vmem>>, vector<128x128xbf16>
    %cst_11 = arith.constant dense<0.000000e+00> : vector<8x128xf32>
    %22 = tpu.matmul %20, %21, %cst_11 {dimension_numbers = #tpu.dot_dimension_numbers<[1], [0], [0], [1], [0, 0, 1, 1], [], []>} : vector<8x128xbf16>, vector<128x128xbf16>, vector<8x128xf32> -> vector<8x128xf32>
    %c0_12 = arith.constant 0 : index
    %c0_13 = arith.constant 0 : index
    %23 = vector.load %arg5[%c0_12, %c0_13] : memref<1x128xf32, #tpu.memory_space<vmem>>, vector<1x128xf32>
    %24 = vector.broadcast %23 : vector<1x128xf32> to vector<8x128xf32>
    %25 = arith.addf %22, %24 : vector<8x128xf32>
    %26 = arith.truncf %25 : vector<8x128xf32> to vector<8x128xbf16>
    %c0_14 = arith.constant 0 : index
    %c0_15 = arith.constant 0 : index
    %27 = vector.load %arg6[%c0_14, %c0_15] : memref<8x128xbf16, #tpu.memory_space<vmem>>, vector<8x128xbf16>
    tpu.vector_store %arg6[%c0_14, %c0_15], %26 {strides = array<i32>} : memref<8x128xbf16, #tpu.memory_space<vmem>>, vector<8x128xbf16>,
    return
  }
  func.func @transform_0(%arg0: i32) -> (i32, i32) {
    %c0_i32 = arith.constant 0 : i32
    %c0_i32_0 = arith.constant 0 : i32
    return %arg0, %c0_i32 : i32, i32
  }
  func.func @transform_1(%arg0: i32) -> (i32, i32) {
    %c0_i32 = arith.constant 0 : i32
    %c0_i32_0 = arith.constant 0 : i32
    %c0_i32_1 = arith.constant 0 : i32
    return %c0_i32, %c0_i32_0 : i32, i32
  }
  func.func @transform_2(%arg0: i32) -> (i32, i32) {
    %c0_i32 = arith.constant 0 : i32
    %c0_i32_0 = arith.constant 0 : i32
    %c0_i32_1 = arith.constant 0 : i32
    return %c0_i32, %c0_i32_0 : i32, i32
  }
  func.func @transform_3(%arg0: i32) -> (i32, i32) {
    %c0_i32 = arith.constant 0 : i32
    %c0_i32_0 = arith.constant 0 : i32
    %c0_i32_1 = arith.constant 0 : i32
    return %c0_i32, %c0_i32_0 : i32, i32
  }
  func.func @transform_4(%arg0: i32) -> (i32, i32) {
    %c0_i32 = arith.constant 0 : i32
    %c0_i32_0 = arith.constant 0 : i32
    %c0_i32_1 = arith.constant 0 : i32
    return %c0_i32, %c0_i32_0 : i32, i32
  }
  func.func @transform_5(%arg0: i32) -> (i32, i32) {
    %c0_i32 = arith.constant 0 : i32
    %c0_i32_0 = arith.constant 0 : i32
    return %arg0, %c0_i32 : i32, i32
  }
}

</mosaic_0001>

<llo_original>
// kernel: mlp_block.1
$region0: #{mlp_block.1}
  #allocation0 [shape = 'u32[]', space=smem, size = 0x4, offset = 0x4, fixed_abs, tag = 'smem constant byte address 0x4 - core index']
  #allocation1 [shape = 'u32[144,128]{1,0:T(1,128)}', space=vmem, size = 0x12000, scoped, tag = 'internal scratch']
  %s0 = inlined_call_operand.vmem [shape: f32[16,128], index: 0, kind: input, shape index: {}]
  %s1 = inlined_call_operand.vmem [shape: bf16[128,128], index: 1, kind: input, shape index: {}]
  %s2 = inlined_call_operand.vmem [shape: f32[1,128], index: 2, kind: input, shape index: {}]
  %s3 = inlined_call_operand.vmem [shape: bf16[128,128], index: 3, kind: input, shape index: {}]
  %s4 = inlined_call_operand.vmem [shape: f32[1,128], index: 4, kind: input, shape index: {}]
  %s5 = inlined_call_operand.hbm [shape: bf16[16,128], index: 5, kind: output, shape index: {}]
  %s6 = sld [smem:[#allocation0]]
  $region53: #{mlp_block.1} parent=0
    _
  %s8 = ssub.s32 1, %s6
  %s9 = scalar_select 0, %s8, %s6
  $region1: #{mlp_block.1} parent=0
    #allocation2 [shape = 'u8[4096]{0}', space=vmem, size = 0x1000, scoped, tag = 'output window, operand 0']
    #allocation3 [shape = 's32[2]{0}', space=sflag, size = 0x8, scoped, tag = 'scoped memory for mlp_block.1']
    %10 = vsyncpa [#allocation3], 0
    %s11 = scalar_lea.sflag [#allocation3], 1
    %12 = vsyncpa %s11, 0
    loop: start=0, step=1, limit=4
    $region2: #{mlp_block.1} parent=1 // loop_pre_header
      _
    $region3: #{mlp_block.1} parent=1 // loop_header
      %s14 = sphi 0, %s18
      %p15 = scmp.ge.s32.totalorder %s14, 4
      %s24 = sphi 0, %s26
      %s27 = sphi 0, %s24
      %s28 = sphi 0, %s27
      %s44 = sphi 0, %s28
      %s48 = sphi 0, %s48
      %s50 = sphi 0, %s48
      %s51 = sphi 0, %s50
      %s65 = sphi 0, %s51
      %s69 = sphi 0, %s69
      %s71 = sphi 0, %s69
      %s72 = sphi 0, %s71
      %s86 = sphi 0, %s72
      %s90 = sphi 0, %s90
      %s92 = sphi 0, %s90
      %s93 = sphi 0, %s92
      %s107 = sphi 0, %s93
      %s111 = sphi 0, %s111
      %s113 = sphi 0, %s111
      %s114 = sphi 0, %s113
      %s128 = sphi 0, %s114
      %s134 = sphi 0, %s136
      %s137 = sphi 0, %s134
      %s138 = sphi 0, %s137
      %s154 = sphi 0, %s138
    $region4: #{mlp_block.1} parent=1 // loop_header_branch
      %17 = sbr.rel (%p15) target = $region8
    $region5: #{mlp_block.1} parent=1 // loop_body
      %s19 = ssub.s32 %s14, 1
      %s20 = ssub.s32 %s14, 2
      %s21 = sadd.s32 %s14, 1
      %s22 = ssub.s32 %s14, %s21
      %p23 = scmp.eq.s32.totalorder %s22, 0
      %s25 = sadd.s32 %s24, 1
      %s26 = scalar_select %p23, %s24, %s25
      %p29 = pneg %p23
      %p30 = scmp.eq.s32.totalorder %s14, 1
      %p31 = por %p29, %p30
      %p32 = scmp.ne.s32.totalorder %s24, %s27
      %p33 = scmp.eq.s32.totalorder %s14, 0
      %p34 = por %p32, %p33
      %p35 = scmp.ne.s32.totalorder %s24, %s27
      %p36 = scmp.eq.s32.totalorder %s19, 1
      %p37 = por %p35, %p36
      %p38 = scmp.ne.s32.totalorder %s27, %s28
      %p39 = scmp.eq.s32.totalorder %s19, 0
      %p40 = por %p38, %p39
      %p41 = scmp.ne.s32.totalorder %s27, %s28
      %p42 = scmp.eq.s32.totalorder %s20, 1
      %p43 = por %p41, %p42
      %p45 = scmp.ne.s32.totalorder %s28, %s44
      %p46 = scmp.eq.s32.totalorder %s20, 0
      %p47 = por %p45, %p46
      %s49 = sadd.s32 %s48, 1
      %p52 = scmp.eq.s32.totalorder %s14, 1
      %p53 = scmp.ne.s32.totalorder %s48, %s50
      %p54 = scmp.eq.s32.totalorder %s14, 0
      %p55 = por %p53, %p54
      %p56 = scmp.ne.s32.totalorder %s48, %s50
      %p57 = scmp.eq.s32.totalorder %s19, 1
      %p58 = por %p56, %p57
      %p59 = scmp.ne.s32.totalorder %s50, %s51
      %p60 = scmp.eq.s32.totalorder %s19, 0
      %p61 = por %p59, %p60
      %p62 = scmp.ne.s32.totalorder %s50, %s51
      %p63 = scmp.eq.s32.totalorder %s20, 1
      %p64 = por %p62, %p63
      %p66 = scmp.ne.s32.totalorder %s51, %s65
      %p67 = scmp.eq.s32.totalorder %s20, 0
      %p68 = por %p66, %p67
      %s70 = sadd.s32 %s69, 1
      %p73 = scmp.eq.s32.totalorder %s14, 1
      %p74 = scmp.ne.s32.totalorder %s69, %s71
      %p75 = scmp.eq.s32.totalorder %s14, 0
      %p76 = por %p74, %p75
      %p77 = scmp.ne.s32.totalorder %s69, %s71
      %p78 = scmp.eq.s32.totalorder %s19, 1
      %p79 = por %p77, %p78
      %p80 = scmp.ne.s32.totalorder %s71, %s72
      %p81 = scmp.eq.s32.totalorder %s19, 0
      %p82 = por %p80, %p81
      %p83 = scmp.ne.s32.totalorder %s71, %s72
      %p84 = scmp.eq.s32.totalorder %s20, 1
      %p85 = por %p83, %p84
      %p87 = scmp.ne.s32.totalorder %s72, %s86
      %p88 = scmp.eq.s32.totalorder %s20, 0
      %p89 = por %p87, %p88
      %s91 = sadd.s32 %s90, 1
      %p94 = scmp.eq.s32.totalorder %s14, 1
      %p95 = scmp.ne.s32.totalorder %s90, %s92
      %p96 = scmp.eq.s32.totalorder %s14, 0
      %p97 = por %p95, %p96
      %p98 = scmp.ne.s32.totalorder %s90, %s92
      %p99 = scmp.eq.s32.totalorder %s19, 1
      %p100 = por %p98, %p99
      %p101 = scmp.ne.s32.totalorder %s92, %s93
      %p102 = scmp.eq.s32.totalorder %s19, 0
      %p103 = por %p101, %p102
      %p104 = scmp.ne.s32.totalorder %s92, %s93
      %p105 = scmp.eq.s32.totalorder %s20, 1
      %p106 = por %p104, %p105
      %p108 = scmp.ne.s32.totalorder %s93, %s107
      %p109 = scmp.eq.s32.totalorder %s20, 0
      %p110 = por %p108, %p109
      %s112 = sadd.s32 %s111, 1
      %p115 = scmp.eq.s32.totalorder %s14, 1
      %p116 = scmp.ne.s32.totalorder %s111, %s113
      %p117 = scmp.eq.s32.totalorder %s14, 0
      %p118 = por %p116, %p117
      %p119 = scmp.ne.s32.totalorder %s111, %s113
      %p120 = scmp.eq.s32.totalorder %s19, 1
      %p121 = por %p119, %p120
      %p122 = scmp.ne.s32.totalorder %s113, %s114
      %p123 = scmp.eq.s32.totalorder %s19, 0
      %p124 = por %p122, %p123
      %p125 = scmp.ne.s32.totalorder %s113, %s114
      %p126 = scmp.eq.s32.totalorder %s20, 1
      %p127 = por %p125, %p126
      %p129 = scmp.ne.s32.totalorder %s114, %s128
      %p130 = scmp.eq.s32.totalorder %s20, 0
      %p131 = por %p129, %p130
      %s132 = ssub.s32 %s14, %s21
      %p133 = scmp.eq.s32.totalorder %s132, 0
      %s135 = sadd.s32 %s134, 1
      %s136 = scalar_select %p133, %s134, %s135
      %p139 = pneg %p133
      %p140 = scmp.eq.s32.totalorder %s14, 1
      %p141 = por %p139, %p140
      %p142 = scmp.ne.s32.totalorder %s134, %s137
      %p143 = scmp.eq.s32.totalorder %s14, 0
      %p144 = por %p142, %p143
      %p145 = scmp.ne.s32.totalorder %s134, %s137
      %p146 = scmp.eq.s32.totalorder %s19, 1
      %p147 = por %p145, %p146
      %p148 = scmp.ne.s32.totalorder %s137, %s138
      %p149 = scmp.eq.s32.totalorder %s19, 0
      %p150 = por %p148, %p149
      %p151 = scmp.ne.s32.totalorder %s137, %s138
      %p152 = scmp.eq.s32.totalorder %s20, 1
      %p153 = por %p151, %p152
      %p155 = scmp.ne.s32.totalorder %s138, %s154
      %p156 = scmp.eq.s32.totalorder %s20, 0
      %p157 = por %p155, %p156
      %p158 = scmp.le.s32.totalorder 1, %s14
      %p159 = scmp.lt.s32.totalorder %s14, 3
      %p160 = pnand %p158, %p159
      %p161 = pneg %p160
      // Predicated region
      $region9: #{mlp_block.1} parent=5 // pred_check
        _
      $region10: #{mlp_block.1} parent=5 // pred_check_branch
        %163 = sbr.rel (%p160) target = $region12
      $region11: #{mlp_block.1} parent=5 // pred_region
        %s164 = ssub.s32 %s14, 1
        // Predicated region
        $region13: #{mlp_block.1} parent=11 // pred_check
          %p165 = pneg %p61
        $region14: #{mlp_block.1} parent=11 // pred_check_branch
          %167 = sbr.rel (%p165) target = $region16
        $region15: #{mlp_block.1} parent=11 // pred_region
          _
        $region16: #{mlp_block.1} parent=11 // pred_fallthru
          _
        // Predicated region
        $region17: #{mlp_block.1} parent=11 // pred_check
          %p168 = pneg %p82
        $region18: #{mlp_block.1} parent=11 // pred_check_branch
          %170 = sbr.rel (%p168) target = $region20
        $region19: #{mlp_block.1} parent=11 // pred_region
          _
        $region20: #{mlp_block.1} parent=11 // pred_fallthru
          _
        // Predicated region
        $region21: #{mlp_block.1} parent=11 // pred_check
          %p171 = pneg %p103
        $region22: #{mlp_block.1} parent=11 // pred_check_branch
          %173 = sbr.rel (%p171) target = $region24
        $region23: #{mlp_block.1} parent=11 // pred_region
          _
        $region24: #{mlp_block.1} parent=11 // pred_fallthru
          _
        // Predicated region
        $region25: #{mlp_block.1} parent=11 // pred_check
          %p174 = pneg %p124
        $region26: #{mlp_block.1} parent=11 // pred_check_branch
          %176 = sbr.rel (%p174) target = $region28
        $region27: #{mlp_block.1} parent=11 // pred_region
          _
        $region28: #{mlp_block.1} parent=11 // pred_fallthru
          _
      $region12: #{mlp_block.1} parent=5 // pred_fallthru
        _
      %p177 = scmp.lt.s32.totalorder %s14, 2
      // Predicated region
      $region29: #{mlp_block.1} parent=5 // pred_check
        %p178 = pneg %p177
      $region30: #{mlp_block.1} parent=5 // pred_check_branch
        %180 = sbr.rel (%p178) target = $region32
      $region31: #{mlp_block.1} parent=5 // pred_region
        // Predicated region
        $region33: #{mlp_block.1} parent=31 // pred_check
          %p181 = pneg %p34
        $region34: #{mlp_block.1} parent=31 // pred_check_branch
          %183 = sbr.rel (%p181) target = $region36
        $region35: #{mlp_block.1} parent=31 // pred_region
          %p184 = scmp.lt.s32.totalorder %s14, 1
          %s185 = scalar_select %p184, %s14, 1
          %s186 = smul.addr %s185, 8
          %s187 = scalar_lea.vmem %s0, %s186
        $region36: #{mlp_block.1} parent=31 // pred_fallthru
          _
      $region32: #{mlp_block.1} parent=5 // pred_fallthru
        _
      %p188 = scmp.le.s32.totalorder 1, %s14
      %p189 = scmp.lt.s32.totalorder %s14, 3
      %p190 = pnand %p188, %p189
      %p191 = pneg %p190
      // Predicated region
      $region37: #{mlp_block.1} parent=5 // pred_check
        _
      $region38: #{mlp_block.1} parent=5 // pred_check_branch
        %193 = sbr.rel (%p190) target = $region40
      $region39: #{mlp_block.1} parent=5 // pred_region
        %s194 = ssub.s32 %s14, 1
        %p195 = scmp.lt.s32.totalorder %s19, 1
        %s196 = scalar_select %p195, %s19, 1
        %s197 = smul.addr %s196, 8
        %s198 = scalar_lea.vmem %s0, %s197
        %p199 = pneg %p40
        %p200 = pneg %p37
        %p201 = pneg %p61
        %p202 = pneg %p58
        %p203 = pneg %p82
        %p204 = pneg %p79
        %p205 = pneg %p103
        %p206 = pneg %p100
        %p207 = pneg %p124
        %p208 = pneg %p121
        %p209 = pneg %p150
        %p210 = pneg %p147
        %s211 = sand.u32 %s137, 1
        %s212 = scalar_lea.sflag [#allocation3], %s211
        %s213 = sand.u32 %s137, 1
        %s214 = smul.addr %s213, 4
        %s215 = scalar_lea.vmem [#allocation2], %s214
        %p216 = scmp.lt.s32.totalorder %s19, 1
        %s217 = scalar_select %p216, %s19, 1
        %s218 = smul.addr %s217, 8
        %s219 = scalar_lea.vmem %s0, %s218
        %v221 = vld [vmem:[%s219] sm:$0xff]
        %v222 = vpack.c.bf16 %v221, %v221
        %v223 = vld [vmem:[%s1] sm:$0xf]
        %v224 = vld [vmem:[%s1 + $0x4] sm:$0xf]
        %v225 = vld [vmem:[%s1 + $0x8] sm:$0xf]
        %v226 = vld [vmem:[%s1 + $0xc] sm:$0xf]
        %v227 = vld [vmem:[%s1 + $0x10] sm:$0xf]
        %v228 = vld [vmem:[%s1 + $0x14] sm:$0xf]
        %v229 = vld [vmem:[%s1 + $0x18] sm:$0xf]
        %v230 = vld [vmem:[%s1 + $0x1c] sm:$0xf]
        %v231 = vld [vmem:[%s1 + $0x20] sm:$0xf]
        %v232 = vld [vmem:[%s1 + $0x24] sm:$0xf]
        %v233 = vld [vmem:[%s1 + $0x28] sm:$0xf]
        %v234 = vld [vmem:[%s1 + $0x2c] sm:$0xf]
        %v235 = vld [vmem:[%s1 + $0x30] sm:$0xf]
        %v236 = vld [vmem:[%s1 + $0x34] sm:$0xf]
        %v237 = vld [vmem:[%s1 + $0x38] sm:$0xf]
        %v238 = vld [vmem:[%s1 + $0x3c] sm:$0xf]
        %v239 = vld [vmem:[%s2] sm:$0x1]
        %v241 = vlaneseq
        %v242 = vshrl.u32 %v241, 7
        %v243 = vsub.s32 0, %v242
        %v244 = vrot.slane %v239, %v243
        %v262 = vunpack.c.l.b16 %v223
        %v263 = vunpack.c.l.b16 %v224
        %v264 = vunpack.c.l.b16 %v225
        %v265 = vunpack.c.l.b16 %v226
        %v266 = vunpack.c.l.b16 %v227
        %v267 = vunpack.c.l.b16 %v228
        %v268 = vunpack.c.l.b16 %v229
        %v269 = vunpack.c.l.b16 %v230
        %v270 = vunpack.c.l.b16 %v231
        %v271 = vunpack.c.l.b16 %v232
        %v272 = vunpack.c.l.b16 %v233
        %v273 = vunpack.c.l.b16 %v234
        %v274 = vunpack.c.l.b16 %v235
        %v275 = vunpack.c.l.b16 %v236
        %v276 = vunpack.c.l.b16 %v237
        %v277 = vunpack.c.l.b16 %v238
        %v278 = vpack.c.b16 %v263, %v262
        %v279 = vpack.c.b16 %v265, %v264
        %v280 = vpack.c.b16 %v267, %v266
        %v281 = vpack.c.b16 %v269, %v268
        %v282 = vpack.c.b16 %v271, %v270
        %v283 = vpack.c.b16 %v273, %v272
        %v284 = vpack.c.b16 %v275, %v274
        %v285 = vpack.c.b16 %v277, %v276
        %294 = vmatprep.subr.bf16.mxu0 0
        %295 = vmatpush1.bf16.msra.mxu0 %v285
        %296 = vmatprep.subr.bf16.mxu0 0
        %297 = vmatpush1.bf16.msra.mxu0 %v284
        %298 = vmatprep.subr.bf16.mxu0 0
        %299 = vmatpush1.bf16.msra.mxu0 %v283
        %300 = vmatprep.subr.bf16.mxu0 0
        %301 = vmatpush1.bf16.msra.mxu0 %v282
        %302 = vmatprep.subr.bf16.mxu0 0
        %303 = vmatpush1.bf16.msra.mxu0 %v281
        %304 = vmatprep.subr.bf16.mxu0 0
        %305 = vmatpush1.bf16.msra.mxu0 %v280
        %306 = vmatprep.subr.bf16.mxu0 0
        %307 = vmatpush1.bf16.msra.mxu0 %v279
        %308 = vmatprep.subr.bf16.mxu0 0
        %309 = vmatpush1.bf16.msra.mxu0 %v278
        %310 = vmatprep.subr.bf16.mxu0 0
        %311 = vmatpush2.bf16.msra.mxu0 0
        %312 = vmatprep.subr.bf16.mxu0 0
        %313 = vmatpush2.bf16.msra.mxu0 0
        %314 = vmatprep.subr.bf16.mxu0 0
        %315 = vmatpush2.bf16.msra.mxu0 0
        %316 = vmatprep.subr.bf16.mxu0 0
        %317 = vmatpush2.bf16.msra.mxu0 0
        %318 = vmatprep.subr.bf16.mxu0 0
        %319 = vmatpush2.bf16.msra.mxu0 0
        %320 = vmatprep.subr.bf16.mxu0 0
        %321 = vmatpush2.bf16.msra.mxu0 0
        %322 = vmatprep.subr.bf16.mxu0 0
        %323 = vmatpush2.bf16.msra.mxu0 0
        %324 = vmatprep.subr.bf16.mxu0 0
        %325 = vmatpush2.bf16.msra.mxu0 0
        %326 = vmatprep.mubr.bf16.mxu0 0
        %327 = vmatmul.mubr.bf16.gmra.mxu0 %v222
        %v328 = vpop.f32.mrf.mxu0
        %v329 = vadd.f32 %v244, %v328
        %v330 = vpop.f32.mrf.mxu0
        %v331 = vpop.f32.mrf.mxu0
        %v332 = vpop.f32.mrf.mxu0
        %333 = vdwg.mxu0
        %v334 = vmul.f32 %v329, 0.5
        %v335 = vmul.f32 %v329, 0.044715
        %v336 = vmul.f32 %v335, %v329
        %v337 = vmul.f32 %v336, %v329
        %v338 = vadd.f32 %v329, %v337
        %v339 = vmul.f32 %v338, 0.7978846
        %v340 = vtanh.pop %v339
        %v341 = vadd.f32 %v340, 1.0
        %v342 = vmul.f32 %v334, %v341
        %v343 = vpack.c.bf16 %v342, %v342
        %v344 = vld [vmem:[%s3] sm:$0xf]
        %v345 = vld [vmem:[%s3 + $0x4] sm:$0xf]
        %v346 = vld [vmem:[%s3 + $0x8] sm:$0xf]
        %v347 = vld [vmem:[%s3 + $0xc] sm:$0xf]
        %v348 = vld [vmem:[%s3 + $0x10] sm:$0xf]
        %v349 = vld [vmem:[%s3 + $0x14] sm:$0xf]
        %v350 = vld [vmem:[%s3 + $0x18] sm:$0xf]
        %v351 = vld [vmem:[%s3 + $0x1c] sm:$0xf]
        %v352 = vld [vmem:[%s3 + $0x20] sm:$0xf]
        %v353 = vld [vmem:[%s3 + $0x24] sm:$0xf]
        %v354 = vld [vmem:[%s3 + $0x28] sm:$0xf]
        %v355 = vld [vmem:[%s3 + $0x2c] sm:$0xf]
        %v356 = vld [vmem:[%s3 + $0x30] sm:$0xf]
        %v357 = vld [vmem:[%s3 + $0x34] sm:$0xf]
        %v358 = vld [vmem:[%s3 + $0x38] sm:$0xf]
        %v359 = vld [vmem:[%s3 + $0x3c] sm:$0xf]
        %v360 = vld [vmem:[%s4] sm:$0x1]
        %v362 = vlaneseq
        %v363 = vshrl.u32 %v362, 7
        %v364 = vsub.s32 0, %v363
        %v365 = vrot.slane %v360, %v364
        %v383 = vunpack.c.l.b16 %v344
        %v384 = vunpack.c.l.b16 %v345
        %v385 = vunpack.c.l.b16 %v346
        %v386 = vunpack.c.l.b16 %v347
        %v387 = vunpack.c.l.b16 %v348
        %v388 = vunpack.c.l.b16 %v349
        %v389 = vunpack.c.l.b16 %v350
        %v390 = vunpack.c.l.b16 %v351
        %v391 = vunpack.c.l.b16 %v352
        %v392 = vunpack.c.l.b16 %v353
        %v393 = vunpack.c.l.b16 %v354
        %v394 = vunpack.c.l.b16 %v355
        %v395 = vunpack.c.l.b16 %v356
        %v396 = vunpack.c.l.b16 %v357
        %v397 = vunpack.c.l.b16 %v358
        %v398 = vunpack.c.l.b16 %v359
        %v399 = vpack.c.b16 %v384, %v383
        %v400 = vpack.c.b16 %v386, %v385
        %v401 = vpack.c.b16 %v388, %v387
        %v402 = vpack.c.b16 %v390, %v389
        %v403 = vpack.c.b16 %v392, %v391
        %v404 = vpack.c.b16 %v394, %v393
        %v405 = vpack.c.b16 %v396, %v395
        %v406 = vpack.c.b16 %v398, %v397
        %415 = vmatprep.subr.bf16.mxu0 0
        %416 = vmatpush1.bf16.msra.mxu0 %v406
        %417 = vmatprep.subr.bf16.mxu0 0
        %418 = vmatpush1.bf16.msra.mxu0 %v405
        %419 = vmatprep.subr.bf16.mxu0 0
        %420 = vmatpush1.bf16.msra.mxu0 %v404
        %421 = vmatprep.subr.bf16.mxu0 0
        %422 = vmatpush1.bf16.msra.mxu0 %v403
        %423 = vmatprep.subr.bf16.mxu0 0
        %424 = vmatpush1.bf16.msra.mxu0 %v402
        %425 = vmatprep.subr.bf16.mxu0 0
        %426 = vmatpush1.bf16.msra.mxu0 %v401
        %427 = vmatprep.subr.bf16.mxu0 0
        %428 = vmatpush1.bf16.msra.mxu0 %v400
        %429 = vmatprep.subr.bf16.mxu0 0
        %430 = vmatpush1.bf16.msra.mxu0 %v399
        %431 = vmatprep.subr.bf16.mxu0 0
        %432 = vmatpush2.bf16.msra.mxu0 0
        %433 = vmatprep.subr.bf16.mxu0 0
        %434 = vmatpush2.bf16.msra.mxu0 0
        %435 = vmatprep.subr.bf16.mxu0 0
        %436 = vmatpush2.bf16.msra.mxu0 0
        %437 = vmatprep.subr.bf16.mxu0 0
        %438 = vmatpush2.bf16.msra.mxu0 0
        %439 = vmatprep.subr.bf16.mxu0 0
        %440 = vmatpush2.bf16.msra.mxu0 0
        %441 = vmatprep.subr.bf16.mxu0 0
        %442 = vmatpush2.bf16.msra.mxu0 0
        %443 = vmatprep.subr.bf16.mxu0 0
        %444 = vmatpush2.bf16.msra.mxu0 0
        %445 = vmatprep.subr.bf16.mxu0 0
        %446 = vmatpush2.bf16.msra.mxu0 0
        %447 = vmatprep.mubr.bf16.mxu0 0
        %448 = vmatmul.mubr.bf16.gmra.mxu0 %v343
        %v449 = vpop.f32.mrf.mxu0
        %v450 = vadd.f32 %v365, %v449
        %v451 = vpop.f32.mrf.mxu0
        %v452 = vpop.f32.mrf.mxu0
        %v453 = vpop.f32.mrf.mxu0
        %454 = vdwg.mxu0
        %v455 = vpack.c.bf16 %v450, %v450
        %456 = vst [vmem:[%s215] sm:$0xf] %v455
        %s457 = sand.u32 %s137, 1
        %s458 = scalar_lea.sflag [#allocation3], %s457
        %s459 = sand.u32 %s137, 1
        %s460 = smul.addr %s459, 4
        %s461 = scalar_lea.vmem [#allocation2], %s460
        // Predicated region
        $region41: #{mlp_block.1} parent=39 // pred_check
          %p462 = pneg %p147
        $region42: #{mlp_block.1} parent=39 // pred_check_branch
          %464 = sbr.rel (%p462) target = $region44
        $region43: #{mlp_block.1} parent=39 // pred_region
          %s466 = ssub.s32 64, 64
          %467 = vsyncadd %s458, %s466
          %s468 = smul.addr %s19, 64
          %s469 = scalar_lea.hbm %s5, %s468
          %s471 = sshll.u32 %s461, 4
          %s472 = int_to_ptr.vmem [resolvable:$true] %s471
          %474 = dma.vmem_to_hbm [thread:$0]  %s472, 64, %s469, %s458
        $region44: #{mlp_block.1} parent=39 // pred_fallthru
          _
      $region40: #{mlp_block.1} parent=5 // pred_fallthru
        _
      %p475 = scmp.le.s32.totalorder 2, %s14
      // Predicated region
      $region45: #{mlp_block.1} parent=5 // pred_check
        %p476 = pneg %p475
      $region46: #{mlp_block.1} parent=5 // pred_check_branch
        %478 = sbr.rel (%p476) target = $region48
      $region47: #{mlp_block.1} parent=5 // pred_region
        %s479 = ssub.s32 %s14, 2
        // Predicated region
        $region49: #{mlp_block.1} parent=47 // pred_check
          %p480 = pneg %p153
        $region50: #{mlp_block.1} parent=47 // pred_check_branch
          %482 = sbr.rel (%p480) target = $region52
        $region51: #{mlp_block.1} parent=47 // pred_region
          %s483 = sand.u32 %s138, 1
          %s484 = scalar_lea.sflag [#allocation3], %s483
          %s485 = sand.u32 %s138, 1
          %s486 = smul.addr %s485, 4
          %s487 = scalar_lea.vmem [#allocation2], %s486
          %488 = dma.done %s484, 64
        $region52: #{mlp_block.1} parent=47 // pred_fallthru
          _
      $region48: #{mlp_block.1} parent=5 // pred_fallthru
        _
    $region6: #{mlp_block.1} parent=1 // loop_footer
      %s18 = sadd.s32 1, %s14
    $region7: #{mlp_block.1} parent=1 // loop_footer_branch
      %13 = sbr.rel target = $region3
    $region8: #{mlp_block.1} parent=1 // loop_exit
      _
    %489 = vsyncpa [#allocation3], 1
    %s490 = scalar_lea.sflag [#allocation3], 1
    %491 = vsyncpa %s490, 1

</llo_original>
